<compile_context>
chip_gen: v5e
topology: v5e:2x2
jax: 0.10.0
libtpu: 0.0.40
codegen_flags: <defaults>
</compile_context>

<pallas_src>
import functools

import jax
import jax.numpy as jnp
from jax.experimental import pallas as pl
from jax.experimental.pallas import tpu as pltpu


def _acl_kernel(pred_ref, target_ref, out_ref, acc_ref, *, smooth):
    c = pl.program_id(1)
    nc = pl.num_programs(1)

    # sigmoid via tanh: exact identity, single EUP op instead of exp+recip.
    logits = pred_ref[0, 0].astype(jnp.float32)          # (H, W)
    p = 0.5 * jnp.tanh(0.5 * logits) + 0.5               # = sigmoid(logits)
    H, W = p.shape

    # ---- contour length term (lane-dense, mask instead of narrow slices) ----
    # dx[a, b] = p[a+2, b] - p[a+1, b]   (valid for a <= H-3)
    dx = p[2:, :] - p[1:-1, :]                            # (H-2, W), full W
    # dy[a, b] = p[a, b+2] - p[a, b+1]   (valid for b <= W-3); lane rolls keep
    # full lane width; wrapped columns are zeroed by the mask below.
    p_c1 = pltpu.roll(p, W - 1, axis=1)                   # p[a, (b+1) % W]
    p_c2 = pltpu.roll(p, W - 2, axis=1)                   # p[a, (b+2) % W]
    dy = (p_c2 - p_c1)[: H - 2, :]                        # (H-2, W)

    col = jax.lax.broadcasted_iota(jnp.int32, (H - 2, W), 1)
    colmask = (col < (W - 2)).astype(jnp.float32)
    # sum of squares is already non-negative -> no abs needed.
    term = jnp.sqrt(dx * dx + dy * dy + smooth) * colmask  # (H-2, W)

    # ---- per-channel accumulation (pure VPU; no per-step tree reduce) -------
    @pl.when(c == 0)
    def _():
        acc_ref[...] = term
        # Region terms use channel 0 only (C_1 == 1, C_2 == 0).  Reduce over
        # sublanes now; the cross-lane reduce + abs happen outside the kernel.
        t0 = target_ref[0, 0].astype(jnp.float32)
        reg_in = p * (t0 - 1.0) * (t0 - 1.0)
        reg_out = (1.0 - p) * (t0 * t0)
        out_ref[0, 1:2, :] = jnp.sum(reg_in, axis=0, keepdims=True)
        out_ref[0, 2:3, :] = jnp.sum(reg_out, axis=0, keepdims=True)

    @pl.when(c > 0)
    def _():
        acc_ref[...] += term

    # ---- finalize once per batch element ------------------------------------
    @pl.when(c == nc - 1)
    def _():
        out_ref[0, 0:1, :] = jnp.sum(acc_ref[...], axis=0, keepdims=True)


def active_contour_loss(pred, target, smooth=1e-8):
    B, C, H, W = pred.shape
    assert H >= 3 and W >= 3, "ActiveContourLoss requires H >= 3 and W >= 3"

    # Per-batch, lane-dense partial sums: row 0 = contour length,
    # row 1 = region_in, row 2 = region_out (each still spread over W lanes).
    partials = pl.pallas_call(
        functools.partial(_acl_kernel, smooth=float(smooth)),
        out_shape=jax.ShapeDtypeStruct((B, 3, W), jnp.float32),
        grid_spec=pltpu.PrefetchScalarGridSpec(
            num_scalar_prefetch=0,
            grid=(B, C),
            in_specs=[
                # one (H, W) channel image per step
                pl.BlockSpec((1, 1, H, W), lambda b, c: (b, c, 0, 0)),
                # target channel 0 stays resident across the channel sweep
                pl.BlockSpec((1, 1, H, W), lambda b, c: (b, 0, 0, 0)),
            ],
            out_specs=pl.BlockSpec((1, 3, W), lambda b, c: (b, 0, 0)),
            scratch_shapes=[pltpu.VMEM((H - 2, W), jnp.float32)],
        ),
        compiler_params=pltpu.CompilerParams(
            dimension_semantics=("parallel", "arbitrary"),
            vmem_limit_bytes=32 * 1024 * 1024,
        ),
    )(pred, target)

    # Final cross-lane / cross-batch reduction in JAX; abs() on the *global*
    # region sums, exactly as in the PyTorch module.
    lenth = jnp.sum(partials[:, 0, :])
    region_in = jnp.abs(jnp.sum(partials[:, 1, :]))
    region_out = jnp.abs(jnp.sum(partials[:, 2, :]))
    lambdaP = 1.0
    mu = 1.0
    return lenth + lambdaP * (mu * region_in + region_out)


def _reference(pred, target, smooth=1e-8):
    # pure-JAX reference mirroring the PyTorch forward
    p = jax.nn.sigmoid(pred.astype(jnp.float32))
    x = p[:, :, 1:, :] - p[:, :, :-1, :]
    y = p[:, :, :, 1:] - p[:, :, :, :-1]
    delta_x = x[:, :, 1:, :-2] ** 2
    delta_y = y[:, :, :-2, 1:] ** 2
    delta_u = jnp.abs(delta_x + delta_y)
    lenth = jnp.sum(jnp.sqrt(delta_u + smooth))
    t0 = target[:, 0, :, :].astype(jnp.float32)
    p0 = p[:, 0, :, :]
    region_in = jnp.abs(jnp.sum(p0 * (t0 - 1.0) ** 2))
    region_out = jnp.abs(jnp.sum((1.0 - p0) * t0 ** 2))
    return lenth + region_in + region_out


if __name__ == "__main__":
    key = jax.random.PRNGKey(0)
    k1, k2 = jax.random.split(key)
    # Module implies large (512x512) images; use a small lane-native 128x128.
    B, C, H, W = 2, 4, 128, 128
    pred = jax.random.normal(k1, (B, C, H, W), dtype=jnp.float32)
    target = (jax.random.uniform(k2, (B, C, H, W)) > 0.5).astype(jnp.float32)

    loss = jax.jit(active_contour_loss)(pred, target)
    jax.block_until_ready(loss)

    ref = _reference(pred, target)
    assert jnp.allclose(loss, ref, rtol=1e-3, atol=1e-2), (loss, ref)
    print("KERNEL_OK")
</pallas_src>

<mosaic_0001>
module attributes {stable_mosaic.version = 11 : i64} {
  func.func @_acl_kernel(%arg0: i32, %arg1: i32, %arg2: memref<1x1x128x128xf32, #tpu.memory_space<vmem>>, %arg3: memref<1x1x128x128xf32, #tpu.memory_space<vmem>>, %arg4: memref<1x3x128xf32, #tpu.memory_space<vmem>>, %arg5: memref<126x128xf32, #tpu.memory_space<vmem>>) attributes {dimension_semantics = [#tpu.dimension_semantics<parallel>, #tpu.dimension_semantics<arbitrary>], iteration_bounds = array<i64: 2, 4>, scalar_prefetch = 0 : i64, scratch_operands = 1 : i64, tpu.core_type = #tpu.core_type<tc>, window_params = [{transform_indices = @transform_0, window_bounds = array<i64: 1, 1, 128, 128>}, {transform_indices = @transform_1, window_bounds = array<i64: 1, 1, 128, 128>}, {transform_indices = @transform_2, window_bounds = array<i64: 1, 3, 128>}]} {
    %c0 = arith.constant 0 : index
    %c0_0 = arith.constant 0 : index
    %c0_1 = arith.constant 0 : index
    %c0_2 = arith.constant 0 : index
    %0 = vector.load %arg2[%c0, %c0_0, %c0_1, %c0_2] : memref<1x1x128x128xf32, #tpu.memory_space<vmem>>, vector<1x1x128x128xf32>
    %1 = vector.shape_cast %0 : vector<1x1x128x128xf32> to vector<128x128xf32>
    %cst = arith.constant 5.000000e-01 : f32
    %2 = vector.broadcast %cst : f32 to vector<128x128xf32>
    %3 = arith.mulf %2, %1 : vector<128x128xf32>
    %4 = math.tanh %3 : vector<128x128xf32>
    %cst_3 = arith.constant 5.000000e-01 : f32
    %5 = vector.broadcast %cst_3 : f32 to vector<128x128xf32>
    %6 = arith.mulf %5, %4 : vector<128x128xf32>
    %cst_4 = arith.constant 5.000000e-01 : f32
    %7 = vector.broadcast %cst_4 : f32 to vector<128x128xf32>
    %8 = arith.addf %6, %7 : vector<128x128xf32>
    %9 = vector.extract_strided_slice %8 {offsets = [2, 0], sizes = [126, 128], strides = [1, 1]} : vector<128x128xf32> to vector<126x128xf32>
    %10 = vector.extract_strided_slice %8 {offsets = [1, 0], sizes = [126, 128], strides = [1, 1]} : vector<128x128xf32> to vector<126x128xf32>
    %11 = arith.subf %9, %10 : vector<126x128xf32>
    %c127_i32 = arith.constant 127 : i32
    %12 = tpu.dynamic_rotate %8 by %c127_i32 dim 1 : vector<128x128xf32>, i32 -> vector<128x128xf32>
    %c126_i32 = arith.constant 126 : i32
    %13 = tpu.dynamic_rotate %8 by %c126_i32 dim 1 : vector<128x128xf32>, i32 -> vector<128x128xf32>
    %14 = arith.subf %13, %12 : vector<128x128xf32>
    %15 = vector.extract_strided_slice %14 {offsets = [0, 0], sizes = [126, 128], strides = [1, 1]} : vector<128x128xf32> to vector<126x128xf32>
    %16 = tpu.iota {dimensions = array<i32: 1>} : vector<126x128xi32>
    %c126_i32_5 = arith.constant 126 : i32
    %17 = vector.broadcast %c126_i32_5 : i32 to vector<126x128xi32>
    %18 = arith.cmpi slt, %16, %17 : vector<126x128xi32>
    %19 = arith.extui %18 : vector<126x128xi1> to vector<126x128xi32>
    %20 = arith.sitofp %19 : vector<126x128xi32> to vector<126x128xf32>
    %21 = arith.mulf %11, %11 : vector<126x128xf32>
    %22 = arith.mulf %15, %15 : vector<126x128xf32>
    %23 = arith.addf %21, %22 : vector<126x128xf32>
    %cst_6 = arith.constant 9.99999993E-9 : f32
    %24 = vector.broadcast %cst_6 : f32 to vector<126x128xf32>
    %25 = arith.addf %23, %24 : vector<126x128xf32>
    %26 = math.sqrt %25 : vector<126x128xf32>
    %27 = arith.mulf %26, %20 : vector<126x128xf32>
    %c0_i32 = arith.constant 0 : i32
    %28 = arith.cmpi eq, %arg1, %c0_i32 : i32
    %29 = arith.extui %28 : i1 to i32
    %c0_i32_7 = arith.constant 0 : i32
    %30 = arith.cmpi ne, %29, %c0_i32_7 : i32
    scf.if %30 {
      %c0_11 = arith.constant 0 : index
      %c0_12 = arith.constant 0 : index
      %37 = vector.load %arg5[%c0_11, %c0_12] : memref<126x128xf32, #tpu.memory_space<vmem>>, vector<126x128xf32>
      tpu.vector_store %arg5[%c0_11, %c0_12], %27 {strides = array<i32>} : memref<126x128xf32, #tpu.memory_space<vmem>>, vector<126x128xf32>,
      %c0_13 = arith.constant 0 : index
      %c0_14 = arith.constant 0 : index
      %c0_15 = arith.constant 0 : index
      %c0_16 = arith.constant 0 : index
      %38 = vector.load %arg3[%c0_13, %c0_14, %c0_15, %c0_16] : memref<1x1x128x128xf32, #tpu.memory_space<vmem>>, vector<1x1x128x128xf32>
      %39 = vector.shape_cast %38 : vector<1x1x128x128xf32> to vector<128x128xf32>
      %cst_17 = arith.constant 1.000000e+00 : f32
      %40 = vector.broadcast %cst_17 : f32 to vector<128x128xf32>
      %41 = arith.subf %39, %40 : vector<128x128xf32>
      %42 = arith.mulf %8, %41 : vector<128x128xf32>
      %cst_18 = arith.constant 1.000000e+00 : f32
      %43 = vector.broadcast %cst_18 : f32 to vector<128x128xf32>
      %44 = arith.subf %39, %43 : vector<128x128xf32>
      %45 = arith.mulf %42, %44 : vector<128x128xf32>
      %cst_19 = arith.constant 1.000000e+00 : f32
      %46 = vector.broadcast %cst_19 : f32 to vector<128x128xf32>
      %47 = arith.subf %46, %8 : vector<128x128xf32>
      %48 = arith.mulf %39, %39 : vector<128x128xf32>
      %49 = arith.mulf %47, %48 : vector<128x128xf32>
      %cst_20 = arith.constant dense<0.000000e+00> : vector<128xf32>
      %50 = vector.multi_reduction <add>, %45, %cst_20 [0] : vector<128x128xf32> to vector<128xf32>
      %51 = vector.shape_cast %50 : vector<128xf32> to vector<1x128xf32>
      %c0_21 = arith.constant 0 : index
      %c1 = arith.constant 1 : index
      %c0_22 = arith.constant 0 : index
      %52 = vector.load %arg4[%c0_21, %c1, %c0_22] : memref<1x3x128xf32, #tpu.memory_space<vmem>>, vector<1x1x128xf32>
      %53 = vector.shape_cast %52 : vector<1x1x128xf32> to vector<1x128xf32>
      %54 = vector.shape_cast %51 : vector<1x128xf32> to vector<1x1x128xf32>
      tpu.vector_store %arg4[%c0_21, %c1, %c0_22], %54 {strides = array<i32>} : memref<1x3x128xf32, #tpu.memory_space<vmem>>, vector<1x1x128xf32>,
      %cst_23 = arith.constant dense<0.000000e+00> : vector<128xf32>
      %55 = vector.multi_reduction <add>, %49, %cst_23 [0] : vector<128x128xf32> to vector<128xf32>
      %56 = vector.shape_cast %55 : vector<128xf32> to vector<1x128xf32>
      %c0_24 = arith.constant 0 : index
      %c2 = arith.constant 2 : index
      %c0_25 = arith.constant 0 : index
      %57 = vector.load %arg4[%c0_24, %c2, %c0_25] : memref<1x3x128xf32, #tpu.memory_space<vmem>>, vector<1x1x128xf32>
      %58 = vector.shape_cast %57 : vector<1x1x128xf32> to vector<1x128xf32>
      %59 = vector.shape_cast %56 : vector<1x128xf32> to vector<1x1x128xf32>
      tpu.vector_store %arg4[%c0_24, %c2, %c0_25], %59 {strides = array<i32>} : memref<1x3x128xf32, #tpu.memory_space<vmem>>, vector<1x1x128xf32>,
    } else {
    }
    %c0_i32_8 = arith.constant 0 : i32
    %31 = arith.cmpi sgt, %arg1, %c0_i32_8 : i32
    %32 = arith.extui %31 : i1 to i32
    %c0_i32_9 = arith.constant 0 : i32
    %33 = arith.cmpi ne, %32, %c0_i32_9 : i32
    scf.if %33 {
      %c0_11 = arith.constant 0 : index
      %c0_12 = arith.constant 0 : index
      %37 = vector.load %arg5[%c0_11, %c0_12] : memref<126x128xf32, #tpu.memory_space<vmem>>, vector<126x128xf32>
      %38 = arith.addf %37, %27 : vector<126x128xf32>
      %c0_13 = arith.constant 0 : index
      %c0_14 = arith.constant 0 : index
      %39 = vector.load %arg5[%c0_13, %c0_14] : memref<126x128xf32, #tpu.memory_space<vmem>>, vector<126x128xf32>
      tpu.vector_store %arg5[%c0_13, %c0_14], %38 {strides = array<i32>} : memref<126x128xf32, #tpu.memory_space<vmem>>, vector<126x128xf32>,
    } else {
    }
    %c3_i32 = arith.constant 3 : i32
    %34 = arith.cmpi eq, %arg1, %c3_i32 : i32
    %35 = arith.extui %34 : i1 to i32
    %c0_i32_10 = arith.constant 0 : i32
    %36 = arith.cmpi ne, %35, %c0_i32_10 : i32
    scf.if %36 {
      %c0_11 = arith.constant 0 : index
      %c0_12 = arith.constant 0 : index
      %37 = vector.load %arg5[%c0_11, %c0_12] : memref<126x128xf32, #tpu.memory_space<vmem>>, vector<126x128xf32>
      %cst_13 = arith.constant dense<0.000000e+00> : vector<128xf32>
      %38 = vector.multi_reduction <add>, %37, %cst_13 [0] : vector<126x128xf32> to vector<128xf32>
      %39 = vector.shape_cast %38 : vector<128xf32> to vector<1x128xf32>
      %c0_14 = arith.constant 0 : index
      %c0_15 = arith.constant 0 : index
      %c0_16 = arith.constant 0 : index
      %40 = vector.load %arg4[%c0_14, %c0_15, %c0_16] : memref<1x3x128xf32, #tpu.memory_space<vmem>>, vector<1x1x128xf32>
      %41 = vector.shape_cast %40 : vector<1x1x128xf32> to vector<1x128xf32>
      %42 = vector.shape_cast %39 : vector<1x128xf32> to vector<1x1x128xf32>
      tpu.vector_store %arg4[%c0_14, %c0_15, %c0_16], %42 {strides = array<i32>} : memref<1x3x128xf32, #tpu.memory_space<vmem>>, vector<1x1x128xf32>,
    } else {
    }
    return
  }
  func.func @transform_0(%arg0: i32, %arg1: i32) -> (i32, i32, i32, i32) {
    %c0_i32 = arith.constant 0 : i32
    %c0_i32_0 = arith.constant 0 : i32
    %c0_i32_1 = arith.constant 0 : i32
    return %arg0, %arg1, %c0_i32, %c0_i32_0 : i32, i32, i32, i32
  }
  func.func @transform_1(%arg0: i32, %arg1: i32) -> (i32, i32, i32, i32) {
    %c0_i32 = arith.constant 0 : i32
    %c0_i32_0 = arith.constant 0 : i32
    %c0_i32_1 = arith.constant 0 : i32
    %c0_i32_2 = arith.constant 0 : i32
    return %arg0, %c0_i32, %c0_i32_0, %c0_i32_1 : i32, i32, i32, i32
  }
  func.func @transform_2(%arg0: i32, %arg1: i32) -> (i32, i32, i32) {
    %c0_i32 = arith.constant 0 : i32
    %c0_i32_0 = arith.constant 0 : i32
    %c0_i32_1 = arith.constant 0 : i32
    return %arg0, %c0_i32, %c0_i32_0 : i32, i32, i32
  }
}

</mosaic_0001>

<llo_original>
// kernel: active_contour_loss.1
$region0: #{active_contour_loss.1}
  #allocation0 [shape = 'u32[]', space=smem, size = 0x4, offset = 0x4, fixed_abs, tag = 'smem constant byte address 0x4 - core index']
  #allocation1 [shape = 'u32[72,128]{1,0:T(1,128)}', space=vmem, size = 0x9000, scoped, tag = 'internal scratch']
  #allocation2 [shape = 'f32[126,128]{1,0:T(8,128)}', space=vmem, size = 0x10000, scoped, tag = 'scratch operand']
  %s0 = inlined_call_operand.hbm [shape: f32[2,4,128,128], index: 0, kind: input, shape index: {}]
  %s1 = inlined_call_operand.hbm [shape: f32[2,4,128,128], index: 1, kind: input, shape index: {}]
  %s2 = inlined_call_operand.vmem [shape: f32[2,3,128], index: 2, kind: output, shape index: {}]
  %s3 = sld [smem:[#allocation0]]
  $region61: #{active_contour_loss.1} parent=0
    _
  %s5 = ssub.s32 1, %s3
  %s6 = scalar_select 0, %s5, %s3
  $region1: #{active_contour_loss.1} parent=0
    #allocation3 [shape = 'u8[131072]{0}', space=vmem, size = 0x20000, scoped, tag = 'input window, operand 0']
    #allocation4 [shape = 's32[2]{0}', space=sflag, size = 0x8, scoped, tag = 'scoped memory for active_contour_loss.1']
    #allocation5 [shape = 'u8[131072]{0}', space=vmem, size = 0x20000, scoped, tag = 'input window, operand 1']
    #allocation6 [shape = 's32[2]{0}', space=sflag, size = 0x8, scoped, tag = 'scoped memory for active_contour_loss.1']
    %7 = vsyncpa [#allocation4], 0
    %s8 = scalar_lea.sflag [#allocation4], 1
    %9 = vsyncpa %s8, 0
    %10 = vsyncpa [#allocation6], 0
    %s11 = scalar_lea.sflag [#allocation6], 1
    %12 = vsyncpa %s11, 0
    loop: start=0, step=1, limit=10
    $region2: #{active_contour_loss.1} parent=1 // loop_pre_header
      _
    $region3: #{active_contour_loss.1} parent=1 // loop_header
      %s14 = sphi 0, %s18
      %p15 = scmp.ge.s32.totalorder %s14, 10
      %s21 = sphi 0, %s33
      %s22 = sphi 0, %s29
      %s23 = sphi 0, %s21
      %s24 = sphi 0, %s22
      %s25 = sphi 0, %s23
      %s26 = sphi 0, %s24
      %s38 = sphi 0, %s40
      %s41 = sphi 0, %s38
      %s42 = sphi 0, %s41
      %s58 = sphi 0, %s42
      %s64 = sphi 0, %s66
      %s67 = sphi 0, %s64
      %s68 = sphi 0, %s67
      %s84 = sphi 0, %s68
      %s90 = sphi 0, %s92
      %s93 = sphi 0, %s90
      %s94 = sphi 0, %s93
      %s110 = sphi 0, %s94
    $region4: #{active_contour_loss.1} parent=1 // loop_header_branch
      %17 = sbr.rel (%p15) target = $region8
    $region5: #{active_contour_loss.1} parent=1 // loop_body
      %s19 = ssub.s32 %s14, 1
      %s20 = ssub.s32 %s14, 2
      %s27 = sadd.s32 1, %s22
      %p28 = scmp.ge.s32.totalorder %s27, 4
      %s29 = scalar_select %p28, 0, %s27
      %s30 = sadd.s32 1, %s21
      %s31 = scalar_select %p28, %s30, %s21
      %p32 = scmp.ge.s32.totalorder %s31, 2
      %s33 = scalar_select %p32, 0, %s31
      %s34 = ssub.s32 %s21, %s33
      %s35 = ssub.s32 %s22, %s29
      %s36 = sor.u32 %s34, %s35
      %p37 = scmp.eq.s32.totalorder %s36, 0
      %s39 = sadd.s32 %s38, 1
      %s40 = scalar_select %p37, %s38, %s39
      %p43 = pneg %p37
      %p44 = scmp.eq.s32.totalorder %s14, 7
      %p45 = por %p43, %p44
      %p46 = scmp.ne.s32.totalorder %s38, %s41
      %p47 = scmp.eq.s32.totalorder %s14, 0
      %p48 = por %p46, %p47
      %p49 = scmp.ne.s32.totalorder %s38, %s41
      %p50 = scmp.eq.s32.totalorder %s19, 7
      %p51 = por %p49, %p50
      %p52 = scmp.ne.s32.totalorder %s41, %s42
      %p53 = scmp.eq.s32.totalorder %s19, 0
      %p54 = por %p52, %p53
      %p55 = scmp.ne.s32.totalorder %s41, %s42
      %p56 = scmp.eq.s32.totalorder %s20, 7
      %p57 = por %p55, %p56
      %p59 = scmp.ne.s32.totalorder %s42, %s58
      %p60 = scmp.eq.s32.totalorder %s20, 0
      %p61 = por %p59, %p60
      %s62 = ssub.s32 %s21, %s33
      %p63 = scmp.eq.s32.totalorder %s62, 0
      %s65 = sadd.s32 %s64, 1
      %s66 = scalar_select %p63, %s64, %s65
      %p69 = pneg %p63
      %p70 = scmp.eq.s32.totalorder %s14, 7
      %p71 = por %p69, %p70
      %p72 = scmp.ne.s32.totalorder %s64, %s67
      %p73 = scmp.eq.s32.totalorder %s14, 0
      %p74 = por %p72, %p73
      %p75 = scmp.ne.s32.totalorder %s64, %s67
      %p76 = scmp.eq.s32.totalorder %s19, 7
      %p77 = por %p75, %p76
      %p78 = scmp.ne.s32.totalorder %s67, %s68
      %p79 = scmp.eq.s32.totalorder %s19, 0
      %p80 = por %p78, %p79
      %p81 = scmp.ne.s32.totalorder %s67, %s68
      %p82 = scmp.eq.s32.totalorder %s20, 7
      %p83 = por %p81, %p82
      %p85 = scmp.ne.s32.totalorder %s68, %s84
      %p86 = scmp.eq.s32.totalorder %s20, 0
      %p87 = por %p85, %p86
      %s88 = ssub.s32 %s21, %s33
      %p89 = scmp.eq.s32.totalorder %s88, 0
      %s91 = sadd.s32 %s90, 1
      %s92 = scalar_select %p89, %s90, %s91
      %p95 = pneg %p89
      %p96 = scmp.eq.s32.totalorder %s14, 7
      %p97 = por %p95, %p96
      %p98 = scmp.ne.s32.totalorder %s90, %s93
      %p99 = scmp.eq.s32.totalorder %s14, 0
      %p100 = por %p98, %p99
      %p101 = scmp.ne.s32.totalorder %s90, %s93
      %p102 = scmp.eq.s32.totalorder %s19, 7
      %p103 = por %p101, %p102
      %p104 = scmp.ne.s32.totalorder %s93, %s94
      %p105 = scmp.eq.s32.totalorder %s19, 0
      %p106 = por %p104, %p105
      %p107 = scmp.ne.s32.totalorder %s93, %s94
      %p108 = scmp.eq.s32.totalorder %s20, 7
      %p109 = por %p107, %p108
      %p111 = scmp.ne.s32.totalorder %s94, %s110
      %p112 = scmp.eq.s32.totalorder %s20, 0
      %p113 = por %p111, %p112
      %p114 = scmp.le.s32.totalorder 1, %s14
      %p115 = scmp.lt.s32.totalorder %s14, 9
      %p116 = pnand %p114, %p115
      %p117 = pneg %p116
      // Predicated region
      $region9: #{active_contour_loss.1} parent=5 // pred_check
        _
      $region10: #{active_contour_loss.1} parent=5 // pred_check_branch
        %119 = sbr.rel (%p116) target = $region12
      $region11: #{active_contour_loss.1} parent=5 // pred_region
        %s120 = ssub.s32 %s14, 1
      $region12: #{active_contour_loss.1} parent=5 // pred_fallthru
        _
      %p121 = scmp.lt.s32.totalorder %s14, 8
      // Predicated region
      $region13: #{active_contour_loss.1} parent=5 // pred_check
        %p122 = pneg %p121
      $region14: #{active_contour_loss.1} parent=5 // pred_check_branch
        %124 = sbr.rel (%p122) target = $region16
      $region15: #{active_contour_loss.1} parent=5 // pred_region
        // Predicated region
        $region17: #{active_contour_loss.1} parent=15 // pred_check
          %p125 = pneg %p48
        $region18: #{active_contour_loss.1} parent=15 // pred_check_branch
          %127 = sbr.rel (%p125) target = $region20
        $region19: #{active_contour_loss.1} parent=15 // pred_region
          %s128 = sand.u32 %s38, 1
          %s129 = scalar_lea.sflag [#allocation4], %s128
          %s130 = sand.u32 %s38, 1
          %s131 = smul.addr %s130, 128
          %s132 = scalar_lea.vmem [#allocation3], %s131
          %134 = vsyncadd %s129, 0
          %s135 = smul.addr %s22, 16
          %s136 = smul.addr %s21, 64
          %s137 = sadd.s32 %s135, %s136
          %s138 = smul.addr %s137, 8
          %s139 = scalar_lea.hbm %s0, %s138
          %s140 = sshll.u32 %s139, 4
          %s141 = int_to_ptr.hbm [resolvable:$true] %s140
          %s142 = sshll.u32 %s132, 4
          %s143 = int_to_ptr.vmem [resolvable:$true] %s142
          %148 = dma.hbm_to_vmem [thread:$0]  %s141, 2048, %s143, %s129, 128, 128, 8
        $region20: #{active_contour_loss.1} parent=15 // pred_fallthru
          _
        // Predicated region
        $region21: #{active_contour_loss.1} parent=15 // pred_check
          %p149 = pneg %p74
        $region22: #{active_contour_loss.1} parent=15 // pred_check_branch
          %151 = sbr.rel (%p149) target = $region24
        $region23: #{active_contour_loss.1} parent=15 // pred_region
          %s152 = sand.u32 %s64, 1
          %s153 = scalar_lea.sflag [#allocation6], %s152
          %s154 = sand.u32 %s64, 1
          %s155 = smul.addr %s154, 128
          %s156 = scalar_lea.vmem [#allocation5], %s155
          %158 = vsyncadd %s153, 0
          %s159 = smul.addr %s21, 64
          %s160 = smul.addr %s159, 8
          %s161 = scalar_lea.hbm %s1, %s160
          %s162 = sshll.u32 %s161, 4
          %s163 = int_to_ptr.hbm [resolvable:$true] %s162
          %s164 = sshll.u32 %s156, 4
          %s165 = int_to_ptr.vmem [resolvable:$true] %s164
          %170 = dma.hbm_to_vmem [thread:$0]  %s163, 2048, %s165, %s153, 128, 128, 8
        $region24: #{active_contour_loss.1} parent=15 // pred_fallthru
          _
      $region16: #{active_contour_loss.1} parent=5 // pred_fallthru
        _
      %p171 = scmp.le.s32.totalorder 1, %s14
      %p172 = scmp.lt.s32.totalorder %s14, 9
      %p173 = pnand %p171, %p172
      %p174 = pneg %p173
      // Predicated region
      $region25: #{active_contour_loss.1} parent=5 // pred_check
        _
      $region26: #{active_contour_loss.1} parent=5 // pred_check_branch
        %176 = sbr.rel (%p173) target = $region28
      $region27: #{active_contour_loss.1} parent=5 // pred_region
        %s177 = ssub.s32 %s14, 1
        %s178 = sand.u32 %s41, 1
        %s179 = scalar_lea.sflag [#allocation4], %s178
        %s180 = sand.u32 %s41, 1
        %s181 = smul.addr %s180, 128
        %s182 = scalar_lea.vmem [#allocation3], %s181
        // Predicated region
        $region29: #{active_contour_loss.1} parent=27 // pred_check
          %p183 = pneg %p54
        $region30: #{active_contour_loss.1} parent=27 // pred_check_branch
          %185 = sbr.rel (%p183) target = $region32
        $region31: #{active_contour_loss.1} parent=27 // pred_region
          %187 = dma.done %s179, 2048
        $region32: #{active_contour_loss.1} parent=27 // pred_fallthru
          _
        %s188 = sand.u32 %s67, 1
        %s189 = scalar_lea.sflag [#allocation6], %s188
        %s190 = sand.u32 %s67, 1
        %s191 = smul.addr %s190, 128
        %s192 = scalar_lea.vmem [#allocation5], %s191
        // Predicated region
        $region33: #{active_contour_loss.1} parent=27 // pred_check
          %p193 = pneg %p80
        $region34: #{active_contour_loss.1} parent=27 // pred_check_branch
          %195 = sbr.rel (%p193) target = $region36
        $region35: #{active_contour_loss.1} parent=27 // pred_region
          %197 = dma.done %s189, 2048
        $region36: #{active_contour_loss.1} parent=27 // pred_fallthru
          _
        %s198 = sand.u32 %s41, 1
        %s199 = scalar_lea.sflag [#allocation4], %s198
        %s200 = sand.u32 %s41, 1
        %s201 = smul.addr %s200, 128
        %s202 = scalar_lea.vmem [#allocation3], %s201
        %p203 = pneg %p54
        %p204 = pneg %p51
        %s205 = sand.u32 %s67, 1
        %s206 = scalar_lea.sflag [#allocation6], %s205
        %s207 = sand.u32 %s67, 1
        %s208 = smul.addr %s207, 128
        %s209 = scalar_lea.vmem [#allocation5], %s208
        %p210 = pneg %p80
        %p211 = pneg %p77
        %p212 = pneg %p106
        %p213 = pneg %p103
        %p214 = scmp.lt.s32.totalorder %s23, 1
        %s215 = scalar_select %p214, %s23, 1
        %s216 = smul.addr %s215, 4
        %s217 = scalar_lea.vmem %s2, %s216
        %p218 = scmp.lt.s32.totalorder %s23, 1
        %s219 = scalar_select %p218, %s23, 1
        %s220 = smul.addr %s219, 4
        %s221 = scalar_lea.vmem %s2, %s220
        %v222 = vld [vmem:[%s182] sm:$0xff]
        %v223 = vld [vmem:[%s182 + $0x8] sm:$0xff]
        %v224 = vld [vmem:[%s182 + $0x10] sm:$0xff]
        %v225 = vld [vmem:[%s182 + $0x18] sm:$0xff]
        %v226 = vld [vmem:[%s182 + $0x20] sm:$0xff]
        %v227 = vld [vmem:[%s182 + $0x28] sm:$0xff]
        %v228 = vld [vmem:[%s182 + $0x30] sm:$0xff]
        %v229 = vld [vmem:[%s182 + $0x38] sm:$0xff]
        %v230 = vld [vmem:[%s182 + $0x40] sm:$0xff]
        %v231 = vld [vmem:[%s182 + $0x48] sm:$0xff]
        %v232 = vld [vmem:[%s182 + $0x50] sm:$0xff]
        %v233 = vld [vmem:[%s182 + $0x58] sm:$0xff]
        %v234 = vld [vmem:[%s182 + $0x60] sm:$0xff]
        %v235 = vld [vmem:[%s182 + $0x68] sm:$0xff]
        %v236 = vld [vmem:[%s182 + $0x70] sm:$0xff]
        %v237 = vld [vmem:[%s182 + $0x78] sm:$0xff]
        %v238 = vmul.f32 %v222, 0.5
        %v239 = vmul.f32 %v223, 0.5
        %v240 = vmul.f32 %v224, 0.5
        %v241 = vmul.f32 %v225, 0.5
        %v242 = vmul.f32 %v226, 0.5
        %v243 = vmul.f32 %v227, 0.5
        %v244 = vmul.f32 %v228, 0.5
        %v245 = vmul.f32 %v229, 0.5
        %v246 = vmul.f32 %v230, 0.5
        %v247 = vmul.f32 %v231, 0.5
        %v248 = vmul.f32 %v232, 0.5
        %v249 = vmul.f32 %v233, 0.5
        %v250 = vmul.f32 %v234, 0.5
        %v251 = vmul.f32 %v235, 0.5
        %v252 = vmul.f32 %v236, 0.5
        %v253 = vmul.f32 %v237, 0.5
        %v254 = vtanh.pop %v238
        %v255 = vtanh.pop %v239
        %v256 = vtanh.pop %v240
        %v257 = vtanh.pop %v241
        %v258 = vtanh.pop %v242
        %v259 = vtanh.pop %v243
        %v260 = vtanh.pop %v244
        %v261 = vtanh.pop %v245
        %v262 = vtanh.pop %v246
        %v263 = vtanh.pop %v247
        %v264 = vtanh.pop %v248
        %v265 = vtanh.pop %v249
        %v266 = vtanh.pop %v250
        %v267 = vtanh.pop %v251
        %v268 = vtanh.pop %v252
        %v269 = vtanh.pop %v253
        %v270 = vmul.f32 %v254, 0.5
        %v271 = vmul.f32 %v255, 0.5
        %v272 = vmul.f32 %v256, 0.5
        %v273 = vmul.f32 %v257, 0.5
        %v274 = vmul.f32 %v258, 0.5
        %v275 = vmul.f32 %v259, 0.5
        %v276 = vmul.f32 %v260, 0.5
        %v277 = vmul.f32 %v261, 0.5
        %v278 = vmul.f32 %v262, 0.5
        %v279 = vmul.f32 %v263, 0.5
        %v280 = vmul.f32 %v264, 0.5
        %v281 = vmul.f32 %v265, 0.5
        %v282 = vmul.f32 %v266, 0.5
        %v283 = vmul.f32 %v267, 0.5
        %v284 = vmul.f32 %v268, 0.5
        %v285 = vmul.f32 %v269, 0.5
        %v286 = vadd.f32 %v270, 0.5
        %v287 = vadd.f32 %v271, 0.5
        %v288 = vadd.f32 %v272, 0.5
        %v289 = vadd.f32 %v273, 0.5
        %v290 = vadd.f32 %v274, 0.5
        %v291 = vadd.f32 %v275, 0.5
        %v292 = vadd.f32 %v276, 0.5
        %v293 = vadd.f32 %v277, 0.5
        %v294 = vadd.f32 %v278, 0.5
        %v295 = vadd.f32 %v279, 0.5
        %v296 = vadd.f32 %v280, 0.5
        %v297 = vadd.f32 %v281, 0.5
        %v298 = vadd.f32 %v282, 0.5
        %v299 = vadd.f32 %v283, 0.5
        %v300 = vadd.f32 %v284, 0.5
        %v301 = vadd.f32 %v285, 0.5
        %vm318 = vcmask 1040384
        %v319 = vrot.slane %v286, 7
        %v320 = vrot.slane %v287, 7
        %v321 = vsel %vm318, %v319, %v320
        %v322 = vrot.slane %v288, 7
        %v323 = vsel %vm318, %v320, %v322
        %v324 = vrot.slane %v289, 7
        %v325 = vsel %vm318, %v322, %v324
        %v326 = vrot.slane %v290, 7
        %v327 = vsel %vm318, %v324, %v326
        %v328 = vrot.slane %v291, 7
        %v329 = vsel %vm318, %v326, %v328
        %v330 = vrot.slane %v292, 7
        %v331 = vsel %vm318, %v328, %v330
        %v332 = vrot.slane %v293, 7
        %v333 = vsel %vm318, %v330, %v332
        %v334 = vrot.slane %v294, 7
        %v335 = vsel %vm318, %v332, %v334
        %v336 = vrot.slane %v295, 7
        %v337 = vsel %vm318, %v334, %v336
        %v338 = vrot.slane %v296, 7
        %v339 = vsel %vm318, %v336, %v338
        %v340 = vrot.slane %v297, 7
        %v341 = vsel %vm318, %v338, %v340
        %v342 = vrot.slane %v298, 7
        %v343 = vsel %vm318, %v340, %v342
        %v344 = vrot.slane %v299, 7
        %v345 = vsel %vm318, %v342, %v344
        %v346 = vrot.slane %v300, 7
        %v347 = vsel %vm318, %v344, %v346
        %v348 = vrot.slane %v301, 7
        %v349 = vsel %vm318, %v346, %v348
        %v366 = vsub.f32 %v286, %v319
        %v367 = vsub.f32 %v287, %v321
        %v368 = vsub.f32 %v288, %v323
        %v369 = vsub.f32 %v289, %v325
        %v370 = vsub.f32 %v290, %v327
        %v371 = vsub.f32 %v291, %v329
        %v372 = vsub.f32 %v292, %v331
        %v373 = vsub.f32 %v293, %v333
        %v374 = vsub.f32 %v294, %v335
        %v375 = vsub.f32 %v295, %v337
        %v376 = vsub.f32 %v296, %v339
        %v377 = vsub.f32 %v297, %v341
        %v378 = vsub.f32 %v298, %v343
        %v379 = vsub.f32 %v299, %v345
        %v380 = vsub.f32 %v300, %v347
        %v381 = vsub.f32 %v301, %v349
        %382 = vrot.lane.b32.xlu0 %v286, 127
        %v383 = vpop.permute.xlu0 %382
        %384 = vrot.lane.b32.xlu0 %v287, 127
        %v385 = vpop.permute.xlu0 %384
        %386 = vrot.lane.b32.xlu0 %v288, 127
        %v387 = vpop.permute.xlu0 %386
        %388 = vrot.lane.b32.xlu0 %v289, 127
        %v389 = vpop.permute.xlu0 %388
        %390 = vrot.lane.b32.xlu0 %v290, 127
        %v391 = vpop.permute.xlu0 %390
        %392 = vrot.lane.b32.xlu0 %v291, 127
        %v393 = vpop.permute.xlu0 %392
        %394 = vrot.lane.b32.xlu0 %v292, 127
        %v395 = vpop.permute.xlu0 %394
        %396 = vrot.lane.b32.xlu0 %v293, 127
        %v397 = vpop.permute.xlu0 %396
        %398 = vrot.lane.b32.xlu0 %v294, 127
        %v399 = vpop.permute.xlu0 %398
        %400 = vrot.lane.b32.xlu0 %v295, 127
        %v401 = vpop.permute.xlu0 %400
        %402 = vrot.lane.b32.xlu0 %v296, 127
        %v403 = vpop.permute.xlu0 %402
        %404 = vrot.lane.b32.xlu0 %v297, 127
        %v405 = vpop.permute.xlu0 %404
        %406 = vrot.lane.b32.xlu0 %v298, 127
        %v407 = vpop.permute.xlu0 %406
        %408 = vrot.lane.b32.xlu0 %v299, 127
        %v409 = vpop.permute.xlu0 %408
        %410 = vrot.lane.b32.xlu0 %v300, 127
        %v411 = vpop.permute.xlu0 %410
        %412 = vrot.lane.b32.xlu0 %v301, 127
        %v413 = vpop.permute.xlu0 %412
        %414 = vrot.lane.b32.xlu0 %v286, 126
        %v415 = vpop.permute.xlu0 %414
        %416 = vrot.lane.b32.xlu0 %v287, 126
        %v417 = vpop.permute.xlu0 %416
        %418 = vrot.lane.b32.xlu0 %v288, 126
        %v419 = vpop.permute.xlu0 %418
        %420 = vrot.lane.b32.xlu0 %v289, 126
        %v421 = vpop.permute.xlu0 %420
        %422 = vrot.lane.b32.xlu0 %v290, 126
        %v423 = vpop.permute.xlu0 %422
        %424 = vrot.lane.b32.xlu0 %v291, 126
        %v425 = vpop.permute.xlu0 %424
        %426 = vrot.lane.b32.xlu0 %v292, 126
        %v427 = vpop.permute.xlu0 %426
        %428 = vrot.lane.b32.xlu0 %v293, 126
        %v429 = vpop.permute.xlu0 %428
        %430 = vrot.lane.b32.xlu0 %v294, 126
        %v431 = vpop.permute.xlu0 %430
        %432 = vrot.lane.b32.xlu0 %v295, 126
        %v433 = vpop.permute.xlu0 %432
        %434 = vrot.lane.b32.xlu0 %v296, 126
        %v435 = vpop.permute.xlu0 %434
        %436 = vrot.lane.b32.xlu0 %v297, 126
        %v437 = vpop.permute.xlu0 %436
        %438 = vrot.lane.b32.xlu0 %v298, 126
        %v439 = vpop.permute.xlu0 %438
        %440 = vrot.lane.b32.xlu0 %v299, 126
        %v441 = vpop.permute.xlu0 %440
        %442 = vrot.lane.b32.xlu0 %v300, 126
        %v443 = vpop.permute.xlu0 %442
        %444 = vrot.lane.b32.xlu0 %v301, 126
        %v445 = vpop.permute.xlu0 %444
        %v446 = vsub.f32 %v415, %v383
        %v447 = vsub.f32 %v417, %v385
        %v448 = vsub.f32 %v419, %v387
        %v449 = vsub.f32 %v421, %v389
        %v450 = vsub.f32 %v423, %v391
        %v451 = vsub.f32 %v425, %v393
        %v452 = vsub.f32 %v427, %v395
        %v453 = vsub.f32 %v429, %v397
        %v454 = vsub.f32 %v431, %v399
        %v455 = vsub.f32 %v433, %v401
        %v456 = vsub.f32 %v435, %v403
        %v457 = vsub.f32 %v437, %v405
        %v458 = vsub.f32 %v439, %v407
        %v459 = vsub.f32 %v441, %v409
        %v460 = vsub.f32 %v443, %v411
        %v461 = vsub.f32 %v445, %v413
        %v462 = vlaneseq
        %v463 = vand.u32 %v462, 127
        %vm464 = vcmp.lt.s32.totalorder %v463, 126
        %v465 = vsel %vm464, 1, 0
        %v466 = vcvt.s32.f32 %v465
        %v467 = vmul.f32 %v366, %v366
        %v468 = vmul.f32 %v367, %v367
        %v469 = vmul.f32 %v368, %v368
        %v470 = vmul.f32 %v369, %v369
        %v471 = vmul.f32 %v370, %v370
        %v472 = vmul.f32 %v371, %v371
        %v473 = vmul.f32 %v372, %v372
        %v474 = vmul.f32 %v373, %v373
        %v475 = vmul.f32 %v374, %v374
        %v476 = vmul.f32 %v375, %v375
        %v477 = vmul.f32 %v376, %v376
        %v478 = vmul.f32 %v377, %v377
        %v479 = vmul.f32 %v378, %v378
        %v480 = vmul.f32 %v379, %v379
        %v481 = vmul.f32 %v380, %v380
        %v482 = vmul.f32 %v381, %v381
        %v483 = vmul.f32 %v446, %v446
        %v484 = vmul.f32 %v447, %v447
        %v485 = vmul.f32 %v448, %v448
        %v486 = vmul.f32 %v449, %v449
        %v487 = vmul.f32 %v450, %v450
        %v488 = vmul.f32 %v451, %v451
        %v489 = vmul.f32 %v452, %v452
        %v490 = vmul.f32 %v453, %v453
        %v491 = vmul.f32 %v454, %v454
        %v492 = vmul.f32 %v455, %v455
        %v493 = vmul.f32 %v456, %v456
        %v494 = vmul.f32 %v457, %v457
        %v495 = vmul.f32 %v458, %v458
        %v496 = vmul.f32 %v459, %v459
        %v497 = vmul.f32 %v460, %v460
        %v498 = vmul.f32 %v461, %v461
        %vm515 = vcmask 1041408
        %v516 = vrot.slane %v483, 6
        %v517 = vrot.slane %v484, 6
        %v518 = vsel %vm515, %v516, %v517
        %v519 = vrot.slane %v485, 6
        %v520 = vsel %vm515, %v517, %v519
        %v521 = vrot.slane %v486, 6
        %v522 = vsel %vm515, %v519, %v521
        %v523 = vrot.slane %v487, 6
        %v524 = vsel %vm515, %v521, %v523
        %v525 = vrot.slane %v488, 6
        %v526 = vsel %vm515, %v523, %v525
        %v527 = vrot.slane %v489, 6
        %v528 = vsel %vm515, %v525, %v527
        %v529 = vrot.slane %v490, 6
        %v530 = vsel %vm515, %v527, %v529
        %v531 = vrot.slane %v491, 6
        %v532 = vsel %vm515, %v529, %v531
        %v533 = vrot.slane %v492, 6
        %v534 = vsel %vm515, %v531, %v533
        %v535 = vrot.slane %v493, 6
        %v536 = vsel %vm515, %v533, %v535
        %v537 = vrot.slane %v494, 6
        %v538 = vsel %vm515, %v535, %v537
        %v539 = vrot.slane %v495, 6
        %v540 = vsel %vm515, %v537, %v539
        %v541 = vrot.slane %v496, 6
        %v542 = vsel %vm515, %v539, %v541
        %v543 = vrot.slane %v497, 6
        %v544 = vsel %vm515, %v541, %v543
        %v545 = vrot.slane %v498, 6
        %v546 = vsel %vm515, %v543, %v545
        %v563 = vadd.f32 %v467, %v516
        %v564 = vadd.f32 %v468, %v518
        %v565 = vadd.f32 %v469, %v520
        %v566 = vadd.f32 %v470, %v522
        %v567 = vadd.f32 %v471, %v524
        %v568 = vadd.f32 %v472, %v526
        %v569 = vadd.f32 %v473, %v528
        %v570 = vadd.f32 %v474, %v530
        %v571 = vadd.f32 %v475, %v532
        %v572 = vadd.f32 %v476, %v534
        %v573 = vadd.f32 %v477, %v536
        %v574 = vadd.f32 %v478, %v538
        %v575 = vadd.f32 %v479, %v540
        %v576 = vadd.f32 %v480, %v542
        %v577 = vadd.f32 %v481, %v544
        %v578 = vadd.f32 %v482, %v546
        %v579 = vadd.f32 %v563, 1e-08
        %v580 = vadd.f32 %v564, 1e-08
        %v581 = vadd.f32 %v565, 1e-08
        %v582 = vadd.f32 %v566, 1e-08
        %v583 = vadd.f32 %v567, 1e-08
        %v584 = vadd.f32 %v568, 1e-08
        %v585 = vadd.f32 %v569, 1e-08
        %v586 = vadd.f32 %v570, 1e-08
        %v587 = vadd.f32 %v571, 1e-08
        %v588 = vadd.f32 %v572, 1e-08
        %v589 = vadd.f32 %v573, 1e-08
        %v590 = vadd.f32 %v574, 1e-08
        %v591 = vadd.f32 %v575, 1e-08
        %v592 = vadd.f32 %v576, 1e-08
        %v593 = vadd.f32 %v577, 1e-08
        %v594 = vadd.f32 %v578, 1e-08
        %v595 = vrsqrt.pop %v579
        %v596 = vmul.f32 %v595, %v579
        %v597 = vmul.f32 %v596, %v595
        %v598 = vmul.f32 0.5, %v597
        %v599 = vsub.f32 1.5, %v598
        %v600 = vmul.f32 %v595, %v599
        %v601 = vmul.f32 %v579, %v600
        %vm602 = vcmp.eq.f32.partialorder %v579, inf
        %v603 = vsel %vm602, %v579, %v601
        %vm604 = vcmp.eq.f32.partialorder %v579, 0.0
        %v605 = vand.u32 %v579, 2147483648
        %v606 = vsel %vm604, %v605, %v603
        %v607 = vrsqrt.pop %v580
        %v608 = vmul.f32 %v607, %v580
        %v609 = vmul.f32 %v608, %v607
        %v610 = vmul.f32 0.5, %v609
        %v611 = vsub.f32 1.5, %v610
        %v612 = vmul.f32 %v607, %v611
        %v613 = vmul.f32 %v580, %v612
        %vm614 = vcmp.eq.f32.partialorder %v580, inf
        %v615 = vsel %vm614, %v580, %v613
        %vm616 = vcmp.eq.f32.partialorder %v580, 0.0
        %v617 = vand.u32 %v580, 2147483648
        %v618 = vsel %vm616, %v617, %v615
        %v619 = vrsqrt.pop %v581
        %v620 = vmul.f32 %v619, %v581
        %v621 = vmul.f32 %v620, %v619
        %v622 = vmul.f32 0.5, %v621
        %v623 = vsub.f32 1.5, %v622
        %v624 = vmul.f32 %v619, %v623
        %v625 = vmul.f32 %v581, %v624
        %vm626 = vcmp.eq.f32.partialorder %v581, inf
        %v627 = vsel %vm626, %v581, %v625
        %vm628 = vcmp.eq.f32.partialorder %v581, 0.0
        %v629 = vand.u32 %v581, 2147483648
        %v630 = vsel %vm628, %v629, %v627
        %v631 = vrsqrt.pop %v582
        %v632 = vmul.f32 %v631, %v582
        %v633 = vmul.f32 %v632, %v631
        %v634 = vmul.f32 0.5, %v633
        %v635 = vsub.f32 1.5, %v634
        %v636 = vmul.f32 %v631, %v635
        %v637 = vmul.f32 %v582, %v636
        %vm638 = vcmp.eq.f32.partialorder %v582, inf
        %v639 = vsel %vm638, %v582, %v637
        %vm640 = vcmp.eq.f32.partialorder %v582, 0.0
        %v641 = vand.u32 %v582, 2147483648
        %v642 = vsel %vm640, %v641, %v639
        %v643 = vrsqrt.pop %v583
        %v644 = vmul.f32 %v643, %v583
        %v645 = vmul.f32 %v644, %v643
        %v646 = vmul.f32 0.5, %v645
        %v647 = vsub.f32 1.5, %v646
        %v648 = vmul.f32 %v643, %v647
        %v649 = vmul.f32 %v583, %v648
        %vm650 = vcmp.eq.f32.partialorder %v583, inf
        %v651 = vsel %vm650, %v583, %v649
        %vm652 = vcmp.eq.f32.partialorder %v583, 0.0
        %v653 = vand.u32 %v583, 2147483648
        %v654 = vsel %vm652, %v653, %v651
        %v655 = vrsqrt.pop %v584
        %v656 = vmul.f32 %v655, %v584
        %v657 = vmul.f32 %v656, %v655
        %v658 = vmul.f32 0.5, %v657
        %v659 = vsub.f32 1.5, %v658
        %v660 = vmul.f32 %v655, %v659
        %v661 = vmul.f32 %v584, %v660
        %vm662 = vcmp.eq.f32.partialorder %v584, inf
        %v663 = vsel %vm662, %v584, %v661
        %vm664 = vcmp.eq.f32.partialorder %v584, 0.0
        %v665 = vand.u32 %v584, 2147483648
        %v666 = vsel %vm664, %v665, %v663
        %v667 = vrsqrt.pop %v585
        %v668 = vmul.f32 %v667, %v585
        %v669 = vmul.f32 %v668, %v667
        %v670 = vmul.f32 0.5, %v669
        %v671 = vsub.f32 1.5, %v670
        %v672 = vmul.f32 %v667, %v671
        %v673 = vmul.f32 %v585, %v672
        %vm674 = vcmp.eq.f32.partialorder %v585, inf
        %v675 = vsel %vm674, %v585, %v673
        %vm676 = vcmp.eq.f32.partialorder %v585, 0.0
        %v677 = vand.u32 %v585, 2147483648
        %v678 = vsel %vm676, %v677, %v675
        %v679 = vrsqrt.pop %v586
        %v680 = vmul.f32 %v679, %v586
        %v681 = vmul.f32 %v680, %v679
        %v682 = vmul.f32 0.5, %v681
        %v683 = vsub.f32 1.5, %v682
        %v684 = vmul.f32 %v679, %v683
        %v685 = vmul.f32 %v586, %v684
        %vm686 = vcmp.eq.f32.partialorder %v586, inf
        %v687 = vsel %vm686, %v586, %v685
        %vm688 = vcmp.eq.f32.partialorder %v586, 0.0
        %v689 = vand.u32 %v586, 2147483648
        %v690 = vsel %vm688, %v689, %v687
        %v691 = vrsqrt.pop %v587
        %v692 = vmul.f32 %v691, %v587
        %v693 = vmul.f32 %v692, %v691
        %v694 = vmul.f32 0.5, %v693
        %v695 = vsub.f32 1.5, %v694
        %v696 = vmul.f32 %v691, %v695
        %v697 = vmul.f32 %v587, %v696
        %vm698 = vcmp.eq.f32.partialorder %v587, inf
        %v699 = vsel %vm698, %v587, %v697
        %vm700 = vcmp.eq.f32.partialorder %v587, 0.0
        %v701 = vand.u32 %v587, 2147483648
        %v702 = vsel %vm700, %v701, %v699
        %v703 = vrsqrt.pop %v588
        %v704 = vmul.f32 %v703, %v588
        %v705 = vmul.f32 %v704, %v703
        %v706 = vmul.f32 0.5, %v705
        %v707 = vsub.f32 1.5, %v706
        %v708 = vmul.f32 %v703, %v707
        %v709 = vmul.f32 %v588, %v708
        %vm710 = vcmp.eq.f32.partialorder %v588, inf
        %v711 = vsel %vm710, %v588, %v709
        %vm712 = vcmp.eq.f32.partialorder %v588, 0.0
        %v713 = vand.u32 %v588, 2147483648
        %v714 = vsel %vm712, %v713, %v711
        %v715 = vrsqrt.pop %v589
        %v716 = vmul.f32 %v715, %v589
        %v717 = vmul.f32 %v716, %v715
        %v718 = vmul.f32 0.5, %v717
        %v719 = vsub.f32 1.5, %v718
        %v720 = vmul.f32 %v715, %v719
        %v721 = vmul.f32 %v589, %v720
        %vm722 = vcmp.eq.f32.partialorder %v589, inf
        %v723 = vsel %vm722, %v589, %v721
        %vm724 = vcmp.eq.f32.partialorder %v589, 0.0
        %v725 = vand.u32 %v589, 2147483648
        %v726 = vsel %vm724, %v725, %v723
        %v727 = vrsqrt.pop %v590
        %v728 = vmul.f32 %v727, %v590
        %v729 = vmul.f32 %v728, %v727
        %v730 = vmul.f32 0.5, %v729
        %v731 = vsub.f32 1.5, %v730
        %v732 = vmul.f32 %v727, %v731
        %v733 = vmul.f32 %v590, %v732
        %vm734 = vcmp.eq.f32.partialorder %v590, inf
        %v735 = vsel %vm734, %v590, %v733
        %vm736 = vcmp.eq.f32.partialorder %v590, 0.0
        %v737 = vand.u32 %v590, 2147483648
        %v738 = vsel %vm736, %v737, %v735
        %v739 = vrsqrt.pop %v591
        %v740 = vmul.f32 %v739, %v591
        %v741 = vmul.f32 %v740, %v739
        %v742 = vmul.f32 0.5, %v741
        %v743 = vsub.f32 1.5, %v742
        %v744 = vmul.f32 %v739, %v743
        %v745 = vmul.f32 %v591, %v744
        %vm746 = vcmp.eq.f32.partialorder %v591, inf
        %v747 = vsel %vm746, %v591, %v745
        %vm748 = vcmp.eq.f32.partialorder %v591, 0.0
        %v749 = vand.u32 %v591, 2147483648
        %v750 = vsel %vm748, %v749, %v747
        %v751 = vrsqrt.pop %v592
        %v752 = vmul.f32 %v751, %v592
        %v753 = vmul.f32 %v752, %v751
        %v754 = vmul.f32 0.5, %v753
        %v755 = vsub.f32 1.5, %v754
        %v756 = vmul.f32 %v751, %v755
        %v757 = vmul.f32 %v592, %v756
        %vm758 = vcmp.eq.f32.partialorder %v592, inf
        %v759 = vsel %vm758, %v592, %v757
        %vm760 = vcmp.eq.f32.partialorder %v592, 0.0
        %v761 = vand.u32 %v592, 2147483648
        %v762 = vsel %vm760, %v761, %v759
        %v763 = vrsqrt.pop %v593
        %v764 = vmul.f32 %v763, %v593
        %v765 = vmul.f32 %v764, %v763
        %v766 = vmul.f32 0.5, %v765
        %v767 = vsub.f32 1.5, %v766
        %v768 = vmul.f32 %v763, %v767
        %v769 = vmul.f32 %v593, %v768
        %vm770 = vcmp.eq.f32.partialorder %v593, inf
        %v771 = vsel %vm770, %v593, %v769
        %vm772 = vcmp.eq.f32.partialorder %v593, 0.0
        %v773 = vand.u32 %v593, 2147483648
        %v774 = vsel %vm772, %v773, %v771
        %v775 = vrsqrt.pop %v594
        %v776 = vmul.f32 %v775, %v594
        %v777 = vmul.f32 %v776, %v775
        %v778 = vmul.f32 0.5, %v777
        %v779 = vsub.f32 1.5, %v778
        %v780 = vmul.f32 %v775, %v779
        %v781 = vmul.f32 %v594, %v780
        %vm782 = vcmp.eq.f32.partialorder %v594, inf
        %v783 = vsel %vm782, %v594, %v781
        %vm784 = vcmp.eq.f32.partialorder %v594, 0.0
        %v785 = vand.u32 %v594, 2147483648
        %v786 = vsel %vm784, %v785, %v783
        %v787 = vmul.f32 %v606, %v466
        %v788 = vmul.f32 %v618, %v466
        %v789 = vmul.f32 %v630, %v466
        %v790 = vmul.f32 %v642, %v466
        %v791 = vmul.f32 %v654, %v466
        %v792 = vmul.f32 %v666, %v466
        %v793 = vmul.f32 %v678, %v466
        %v794 = vmul.f32 %v690, %v466
        %v795 = vmul.f32 %v702, %v466
        %v796 = vmul.f32 %v714, %v466
        %v797 = vmul.f32 %v726, %v466
        %v798 = vmul.f32 %v738, %v466
        %v799 = vmul.f32 %v750, %v466
        %v800 = vmul.f32 %v762, %v466
        %v801 = vmul.f32 %v774, %v466
        %v802 = vmul.f32 %v786, %v466
        %p803 = scmp.eq.s32.totalorder %s24, 0
        // Predicated region
        $region37: #{active_contour_loss.1} parent=27 // pred_check
          %p804 = pneg %p803
        $region38: #{active_contour_loss.1} parent=27 // pred_check_branch
          %806 = sbr.rel (%p804) target = $region40
        $region39: #{active_contour_loss.1} parent=27 // pred_region
          %807 = vst [vmem:[#allocation2 - $0x2] sm:$0xfc] %v787
          %808 = vst [vmem:[#allocation2 + $0x6] sm:$0xff] %v788
          %809 = vst [vmem:[#allocation2 + $0xe] sm:$0xff] %v789
          %810 = vst [vmem:[#allocation2 + $0x16] sm:$0xff] %v790
          %811 = vst [vmem:[#allocation2 + $0x1e] sm:$0xff] %v791
          %812 = vst [vmem:[#allocation2 + $0x26] sm:$0xff] %v792
          %813 = vst [vmem:[#allocation2 + $0x2e] sm:$0xff] %v793
          %814 = vst [vmem:[#allocation2 + $0x36] sm:$0xff] %v794
          %815 = vst [vmem:[#allocation2 + $0x3e] sm:$0xff] %v795
          %816 = vst [vmem:[#allocation2 + $0x46] sm:$0xff] %v796
          %817 = vst [vmem:[#allocation2 + $0x4e] sm:$0xff] %v797
          %818 = vst [vmem:[#allocation2 + $0x56] sm:$0xff] %v798
          %819 = vst [vmem:[#allocation2 + $0x5e] sm:$0xff] %v799
          %820 = vst [vmem:[#allocation2 + $0x66] sm:$0xff] %v800
          %821 = vst [vmem:[#allocation2 + $0x6e] sm:$0xff] %v801
          %822 = vst [vmem:[#allocation2 + $0x76] sm:$0xff] %v802
          %v823 = vld [vmem:[%s192] sm:$0xff]
          %v824 = vld [vmem:[%s192 + $0x8] sm:$0xff]
          %v825 = vld [vmem:[%s192 + $0x10] sm:$0xff]
          %v826 = vld [vmem:[%s192 + $0x18] sm:$0xff]
          %v827 = vld [vmem:[%s192 + $0x20] sm:$0xff]
          %v828 = vld [vmem:[%s192 + $0x28] sm:$0xff]
          %v829 = vld [vmem:[%s192 + $0x30] sm:$0xff]
          %v830 = vld [vmem:[%s192 + $0x38] sm:$0xff]
          %v831 = vld [vmem:[%s192 + $0x40] sm:$0xff]
          %v832 = vld [vmem:[%s192 + $0x48] sm:$0xff]
          %v833 = vld [vmem:[%s192 + $0x50] sm:$0xff]
          %v834 = vld [vmem:[%s192 + $0x58] sm:$0xff]
          %v835 = vld [vmem:[%s192 + $0x60] sm:$0xff]
          %v836 = vld [vmem:[%s192 + $0x68] sm:$0xff]
          %v837 = vld [vmem:[%s192 + $0x70] sm:$0xff]
          %v838 = vld [vmem:[%s192 + $0x78] sm:$0xff]
          %v839 = vsub.f32 %v823, 1.0
          %v840 = vsub.f32 %v824, 1.0
          %v841 = vsub.f32 %v825, 1.0
          %v842 = vsub.f32 %v826, 1.0
          %v843 = vsub.f32 %v827, 1.0
          %v844 = vsub.f32 %v828, 1.0
          %v845 = vsub.f32 %v829, 1.0
          %v846 = vsub.f32 %v830, 1.0
          %v847 = vsub.f32 %v831, 1.0
          %v848 = vsub.f32 %v832, 1.0
          %v849 = vsub.f32 %v833, 1.0
          %v850 = vsub.f32 %v834, 1.0
          %v851 = vsub.f32 %v835, 1.0
          %v852 = vsub.f32 %v836, 1.0
          %v853 = vsub.f32 %v837, 1.0
          %v854 = vsub.f32 %v838, 1.0
          %v855 = vmul.f32 %v286, %v839
          %v856 = vmul.f32 %v287, %v840
          %v857 = vmul.f32 %v288, %v841
          %v858 = vmul.f32 %v289, %v842
          %v859 = vmul.f32 %v290, %v843
          %v860 = vmul.f32 %v291, %v844
          %v861 = vmul.f32 %v292, %v845
          %v862 = vmul.f32 %v293, %v846
          %v863 = vmul.f32 %v294, %v847
          %v864 = vmul.f32 %v295, %v848
          %v865 = vmul.f32 %v296, %v849
          %v866 = vmul.f32 %v297, %v850
          %v867 = vmul.f32 %v298, %v851
          %v868 = vmul.f32 %v299, %v852
          %v869 = vmul.f32 %v300, %v853
          %v870 = vmul.f32 %v301, %v854
          %v871 = vmul.f32 %v855, %v839
          %v872 = vmul.f32 %v856, %v840
          %v873 = vmul.f32 %v857, %v841
          %v874 = vmul.f32 %v858, %v842
          %v875 = vmul.f32 %v859, %v843
          %v876 = vmul.f32 %v860, %v844
          %v877 = vmul.f32 %v861, %v845
          %v878 = vmul.f32 %v862, %v846
          %v879 = vmul.f32 %v863, %v847
          %v880 = vmul.f32 %v864, %v848
          %v881 = vmul.f32 %v865, %v849
          %v882 = vmul.f32 %v866, %v850
          %v883 = vmul.f32 %v867, %v851
          %v884 = vmul.f32 %v868, %v852
          %v885 = vmul.f32 %v869, %v853
          %v886 = vmul.f32 %v870, %v854
          %v887 = vsub.f32 1.0, %v286
          %v888 = vsub.f32 1.0, %v287
          %v889 = vsub.f32 1.0, %v288
          %v890 = vsub.f32 1.0, %v289
          %v891 = vsub.f32 1.0, %v290
          %v892 = vsub.f32 1.0, %v291
          %v893 = vsub.f32 1.0, %v292
          %v894 = vsub.f32 1.0, %v293
          %v895 = vsub.f32 1.0, %v294
          %v896 = vsub.f32 1.0, %v295
          %v897 = vsub.f32 1.0, %v296
          %v898 = vsub.f32 1.0, %v297
          %v899 = vsub.f32 1.0, %v298
          %v900 = vsub.f32 1.0, %v299
          %v901 = vsub.f32 1.0, %v300
          %v902 = vsub.f32 1.0, %v301
          %v903 = vmul.f32 %v823, %v823
          %v904 = vmul.f32 %v824, %v824
          %v905 = vmul.f32 %v825, %v825
          %v906 = vmul.f32 %v826, %v826
          %v907 = vmul.f32 %v827, %v827
          %v908 = vmul.f32 %v828, %v828
          %v909 = vmul.f32 %v829, %v829
          %v910 = vmul.f32 %v830, %v830
          %v911 = vmul.f32 %v831, %v831
          %v912 = vmul.f32 %v832, %v832
          %v913 = vmul.f32 %v833, %v833
          %v914 = vmul.f32 %v834, %v834
          %v915 = vmul.f32 %v835, %v835
          %v916 = vmul.f32 %v836, %v836
          %v917 = vmul.f32 %v837, %v837
          %v918 = vmul.f32 %v838, %v838
          %v919 = vmul.f32 %v887, %v903
          %v920 = vmul.f32 %v888, %v904
          %v921 = vmul.f32 %v889, %v905
          %v922 = vmul.f32 %v890, %v906
          %v923 = vmul.f32 %v891, %v907
          %v924 = vmul.f32 %v892, %v908
          %v925 = vmul.f32 %v893, %v909
          %v926 = vmul.f32 %v894, %v910
          %v927 = vmul.f32 %v895, %v911
          %v928 = vmul.f32 %v896, %v912
          %v929 = vmul.f32 %v897, %v913
          %v930 = vmul.f32 %v898, %v914
          %v931 = vmul.f32 %v899, %v915
          %v932 = vmul.f32 %v900, %v916
          %v933 = vmul.f32 %v901, %v917
          %v934 = vmul.f32 %v902, %v918
          %v935 = vadd.f32 %v871, %v872
          %v936 = vadd.f32 %v935, %v873
          %v937 = vadd.f32 %v936, %v874
          %v938 = vadd.f32 %v937, %v875
          %v939 = vadd.f32 %v938, %v876
          %v940 = vadd.f32 %v939, %v877
          %v941 = vadd.f32 %v940, %v878
          %v942 = vadd.f32 %v941, %v879
          %v943 = vadd.f32 %v942, %v880
          %v944 = vadd.f32 %v943, %v881
          %v945 = vadd.f32 %v944, %v882
          %v946 = vadd.f32 %v945, %v883
          %v947 = vadd.f32 %v946, %v884
          %v948 = vadd.f32 %v947, %v885
          %v949 = vadd.f32 %v948, %v886
          %v950 = vrot.slane %v949, 4
          %v951 = vadd.f32 %v949, %v950
          %v952 = vrot.slane %v951, 2
          %v953 = vadd.f32 %v951, %v952
          %v954 = vrot.slane %v953, 1
          %v955 = vadd.f32 %v953, %v954
          %956 = vst [vmem:[%s221 + $0x1] sm:$0x1] %v955
          %v957 = vadd.f32 %v919, %v920
          %v958 = vadd.f32 %v957, %v921
          %v959 = vadd.f32 %v958, %v922
          %v960 = vadd.f32 %v959, %v923
          %v961 = vadd.f32 %v960, %v924
          %v962 = vadd.f32 %v961, %v925
          %v963 = vadd.f32 %v962, %v926
          %v964 = vadd.f32 %v963, %v927
          %v965 = vadd.f32 %v964, %v928
          %v966 = vadd.f32 %v965, %v929
          %v967 = vadd.f32 %v966, %v930
          %v968 = vadd.f32 %v967, %v931
          %v969 = vadd.f32 %v968, %v932
          %v970 = vadd.f32 %v969, %v933
          %v971 = vadd.f32 %v970, %v934
          %v972 = vrot.slane %v971, 4
          %v973 = vadd.f32 %v971, %v972
          %v974 = vrot.slane %v973, 2
          %v975 = vadd.f32 %v973, %v974
          %v976 = vrot.slane %v975, 1
          %v977 = vadd.f32 %v975, %v976
          %978 = vst [vmem:[%s221 + $0x2] sm:$0x1] %v977
        $region40: #{active_contour_loss.1} parent=27 // pred_fallthru
          _
        %p979 = scmp.gt.s32.totalorder %s24, 0
        // Predicated region
        $region41: #{active_contour_loss.1} parent=27 // pred_check
          %p980 = pneg %p979
        $region42: #{active_contour_loss.1} parent=27 // pred_check_branch
          %982 = sbr.rel (%p980) target = $region44
        $region43: #{active_contour_loss.1} parent=27 // pred_region
          %v983 = vld [vmem:[#allocation2] sm:$0xff]
          %v984 = vld [vmem:[#allocation2 + $0x8] sm:$0xff]
          %v985 = vld [vmem:[#allocation2 + $0x10] sm:$0xff]
          %v986 = vld [vmem:[#allocation2 + $0x18] sm:$0xff]
          %v987 = vld [vmem:[#allocation2 + $0x20] sm:$0xff]
          %v988 = vld [vmem:[#allocation2 + $0x28] sm:$0xff]
          %v989 = vld [vmem:[#allocation2 + $0x30] sm:$0xff]
          %v990 = vld [vmem:[#allocation2 + $0x38] sm:$0xff]
          %v991 = vld [vmem:[#allocation2 + $0x40] sm:$0xff]
          %v992 = vld [vmem:[#allocation2 + $0x48] sm:$0xff]
          %v993 = vld [vmem:[#allocation2 + $0x50] sm:$0xff]
          %v994 = vld [vmem:[#allocation2 + $0x58] sm:$0xff]
          %v995 = vld [vmem:[#allocation2 + $0x60] sm:$0xff]
          %v996 = vld [vmem:[#allocation2 + $0x68] sm:$0xff]
          %v997 = vld [vmem:[#allocation2 + $0x70] sm:$0xff]
          %v998 = vld [vmem:[#allocation2 + $0x78] sm:$0x3f]
          %vm1015 = vcmask 1045504
          %v1016 = vrot.slane %v787, 2
          %v1017 = vrot.slane %v788, 2
          %v1018 = vsel %vm1015, %v1016, %v1017
          %v1019 = vrot.slane %v789, 2
          %v1020 = vsel %vm1015, %v1017, %v1019
          %v1021 = vrot.slane %v790, 2
          %v1022 = vsel %vm1015, %v1019, %v1021
          %v1023 = vrot.slane %v791, 2
          %v1024 = vsel %vm1015, %v1021, %v1023
          %v1025 = vrot.slane %v792, 2
          %v1026 = vsel %vm1015, %v1023, %v1025
          %v1027 = vrot.slane %v793, 2
          %v1028 = vsel %vm1015, %v1025, %v1027
          %v1029 = vrot.slane %v794, 2
          %v1030 = vsel %vm1015, %v1027, %v1029
          %v1031 = vrot.slane %v795, 2
          %v1032 = vsel %vm1015, %v1029, %v1031
          %v1033 = vrot.slane %v796, 2
          %v1034 = vsel %vm1015, %v1031, %v1033
          %v1035 = vrot.slane %v797, 2
          %v1036 = vsel %vm1015, %v1033, %v1035
          %v1037 = vrot.slane %v798, 2
          %v1038 = vsel %vm1015, %v1035, %v1037
          %v1039 = vrot.slane %v799, 2
          %v1040 = vsel %vm1015, %v1037, %v1039
          %v1041 = vrot.slane %v800, 2
          %v1042 = vsel %vm1015, %v1039, %v1041
          %v1043 = vrot.slane %v801, 2
          %v1044 = vsel %vm1015, %v1041, %v1043
          %v1045 = vrot.slane %v802, 2
          %v1046 = vsel %vm1015, %v1043, %v1045
          %v1063 = vadd.f32 %v983, %v1018
          %v1064 = vadd.f32 %v984, %v1020
          %v1065 = vadd.f32 %v985, %v1022
          %v1066 = vadd.f32 %v986, %v1024
          %v1067 = vadd.f32 %v987, %v1026
          %v1068 = vadd.f32 %v988, %v1028
          %v1069 = vadd.f32 %v989, %v1030
          %v1070 = vadd.f32 %v990, %v1032
          %v1071 = vadd.f32 %v991, %v1034
          %v1072 = vadd.f32 %v992, %v1036
          %v1073 = vadd.f32 %v993, %v1038
          %v1074 = vadd.f32 %v994, %v1040
          %v1075 = vadd.f32 %v995, %v1042
          %v1076 = vadd.f32 %v996, %v1044
          %v1077 = vadd.f32 %v997, %v1046
          %v1078 = vadd.f32 %v998, %v1045
          %1079 = vst [vmem:[#allocation2] sm:$0xff] %v1063
          %1080 = vst [vmem:[#allocation2 + $0x8] sm:$0xff] %v1064
          %1081 = vst [vmem:[#allocation2 + $0x10] sm:$0xff] %v1065
          %1082 = vst [vmem:[#allocation2 + $0x18] sm:$0xff] %v1066
          %1083 = vst [vmem:[#allocation2 + $0x20] sm:$0xff] %v1067
          %1084 = vst [vmem:[#allocation2 + $0x28] sm:$0xff] %v1068
          %1085 = vst [vmem:[#allocation2 + $0x30] sm:$0xff] %v1069
          %1086 = vst [vmem:[#allocation2 + $0x38] sm:$0xff] %v1070
          %1087 = vst [vmem:[#allocation2 + $0x40] sm:$0xff] %v1071
          %1088 = vst [vmem:[#allocation2 + $0x48] sm:$0xff] %v1072
          %1089 = vst [vmem:[#allocation2 + $0x50] sm:$0xff] %v1073
          %1090 = vst [vmem:[#allocation2 + $0x58] sm:$0xff] %v1074
          %1091 = vst [vmem:[#allocation2 + $0x60] sm:$0xff] %v1075
          %1092 = vst [vmem:[#allocation2 + $0x68] sm:$0xff] %v1076
          %1093 = vst [vmem:[#allocation2 + $0x70] sm:$0xff] %v1077
          %1094 = vst [vmem:[#allocation2 + $0x78] sm:$0x3f] %v1078
        $region44: #{active_contour_loss.1} parent=27 // pred_fallthru
          _
        %p1095 = scmp.eq.s32.totalorder %s24, 3
        // Predicated region
        $region45: #{active_contour_loss.1} parent=27 // pred_check
          %p1096 = pneg %p1095
        $region46: #{active_contour_loss.1} parent=27 // pred_check_branch
          %1098 = sbr.rel (%p1096) target = $region48
        $region47: #{active_contour_loss.1} parent=27 // pred_region
          %v1099 = vld [vmem:[#allocation2] sm:$0xff]
          %v1100 = vld [vmem:[#allocation2 + $0x8] sm:$0xff]
          %v1101 = vld [vmem:[#allocation2 + $0x10] sm:$0xff]
          %v1102 = vld [vmem:[#allocation2 + $0x18] sm:$0xff]
          %v1103 = vld [vmem:[#allocation2 + $0x20] sm:$0xff]
          %v1104 = vld [vmem:[#allocation2 + $0x28] sm:$0xff]
          %v1105 = vld [vmem:[#allocation2 + $0x30] sm:$0xff]
          %v1106 = vld [vmem:[#allocation2 + $0x38] sm:$0xff]
          %v1107 = vld [vmem:[#allocation2 + $0x40] sm:$0xff]
          %v1108 = vld [vmem:[#allocation2 + $0x48] sm:$0xff]
          %v1109 = vld [vmem:[#allocation2 + $0x50] sm:$0xff]
          %v1110 = vld [vmem:[#allocation2 + $0x58] sm:$0xff]
          %v1111 = vld [vmem:[#allocation2 + $0x60] sm:$0xff]
          %v1112 = vld [vmem:[#allocation2 + $0x68] sm:$0xff]
          %v1113 = vld [vmem:[#allocation2 + $0x70] sm:$0xff]
          %v1114 = vld [vmem:[#allocation2 + $0x78] sm:$0x3f]
          %v1115 = vadd.f32 %v1099, %v1100
          %v1116 = vadd.f32 %v1115, %v1101
          %v1117 = vadd.f32 %v1116, %v1102
          %v1118 = vadd.f32 %v1117, %v1103
          %v1119 = vadd.f32 %v1118, %v1104
          %v1120 = vadd.f32 %v1119, %v1105
          %v1121 = vadd.f32 %v1120, %v1106
          %v1122 = vadd.f32 %v1121, %v1107
          %v1123 = vadd.f32 %v1122, %v1108
          %v1124 = vadd.f32 %v1123, %v1109
          %v1125 = vadd.f32 %v1124, %v1110
          %v1126 = vadd.f32 %v1125, %v1111
          %v1127 = vadd.f32 %v1126, %v1112
          %v1128 = vadd.f32 %v1127, %v1113
          %vm1129 = vcmask 1045504
          %v1130 = vsel %vm1129, %v1114, 0.0
          %v1131 = vadd.f32 %v1128, %v1130
          %v1132 = vrot.slane %v1131, 4
          %v1133 = vadd.f32 %v1131, %v1132
          %v1134 = vrot.slane %v1133, 2
          %v1135 = vadd.f32 %v1133, %v1134
          %v1136 = vrot.slane %v1135, 1
          %v1137 = vadd.f32 %v1135, %v1136
          %1138 = vst [vmem:[%s221] sm:$0x1] %v1137
        $region48: #{active_contour_loss.1} parent=27 // pred_fallthru
          _
        %p1139 = scmp.lt.s32.totalorder %s23, 1
        %s1140 = scalar_select %p1139, %s23, 1
        %s1141 = smul.addr %s1140, 4
        %s1142 = scalar_lea.vmem %s2, %s1141
        // Predicated region
        $region49: #{active_contour_loss.1} parent=27 // pred_check
          %p1143 = pneg %p103
        $region50: #{active_contour_loss.1} parent=27 // pred_check_branch
          %1145 = sbr.rel (%p1143) target = $region52
        $region51: #{active_contour_loss.1} parent=27 // pred_region
          _
        $region52: #{active_contour_loss.1} parent=27 // pred_fallthru
          _
      $region28: #{active_contour_loss.1} parent=5 // pred_fallthru
        _
      %p1146 = scmp.le.s32.totalorder 2, %s14
      // Predicated region
      $region53: #{active_contour_loss.1} parent=5 // pred_check
        %p1147 = pneg %p1146
      $region54: #{active_contour_loss.1} parent=5 // pred_check_branch
        %1149 = sbr.rel (%p1147) target = $region56
      $region55: #{active_contour_loss.1} parent=5 // pred_region
        %s1150 = ssub.s32 %s14, 2
        // Predicated region
        $region57: #{active_contour_loss.1} parent=55 // pred_check
          %p1151 = pneg %p109
        $region58: #{active_contour_loss.1} parent=55 // pred_check_branch
          %1153 = sbr.rel (%p1151) target = $region60
        $region59: #{active_contour_loss.1} parent=55 // pred_region
          %p1154 = scmp.lt.s32.totalorder %s25, 1
          %s1155 = scalar_select %p1154, %s25, 1
          %s1156 = smul.addr %s1155, 4
          %s1157 = scalar_lea.vmem %s2, %s1156
        $region60: #{active_contour_loss.1} parent=55 // pred_fallthru
          _
      $region56: #{active_contour_loss.1} parent=5 // pred_fallthru
        _
    $region6: #{active_contour_loss.1} parent=1 // loop_footer
      %s18 = sadd.s32 1, %s14
    $region7: #{active_contour_loss.1} parent=1 // loop_footer_branch
      %13 = sbr.rel target = $region3
    $region8: #{active_contour_loss.1} parent=1 // loop_exit
      _
    %1158 = vsyncpa [#allocation4], 1
    %s1159 = scalar_lea.sflag [#allocation4], 1
    %1160 = vsyncpa %s1159, 1
    %1161 = vsyncpa [#allocation6], 1
    %s1162 = scalar_lea.sflag [#allocation6], 1
    %1163 = vsyncpa %s1162, 1

</llo_original>
